<compile_context>
chip_gen: v6e
topology: v6e:2x2x1
jax: 0.10.0
libtpu: 0.0.40
codegen_flags: <defaults>
</compile_context>

<pallas_src>
import functools

import jax
import jax.numpy as jnp
from jax.experimental import pallas as pl
from jax.experimental.pallas import tpu as pltpu


def _round_up(x, m):
    return (x + m - 1) // m * m


def policy_scores_kernel(x_ref, w1_ref, b1_ref, w2_ref, b2_ref,
                         embed_t_ref, ebias_ref, out_ref, h2_ref):
    # x_ref:       [TB, DIP]  bf16   [bag_vec | cur_class_embed], zero-padded
    # w1_ref:      [DIP, L1P] bf16   l1 weight, pre-transposed + padded
    # b1_ref:      [1, L1P]   f32
    # w2_ref:      [L1P, E]   bf16   l2 weight, pre-transposed + padded
    # b2_ref:      [1, E]     f32
    # embed_t_ref: [E, TN]    bf16   class-embed^T, column tile j
    # ebias_ref:   [1, TN]    f32    class-embed bias, column tile j
    # out_ref:     [TB, TN]   f32    scores tile (i, j)
    # h2_ref:      [TB, E]    f32    scratch: MLP output, carried across j

    # TODO(synk): dropout is eval-mode identity (no in-kernel PRNG mask).
    @pl.when(pl.program_id(1) == 0)
    def _():
        h1 = jnp.dot(x_ref[...], w1_ref[...],
                     preferred_element_type=jnp.float32) + b1_ref[...]
        h1 = jnp.maximum(h1, 0.0)                                    # [TB, L1P]
        h2 = jnp.dot(h1.astype(jnp.bfloat16), w2_ref[...],
                     preferred_element_type=jnp.float32) + b2_ref[...]
        h2_ref[...] = jnp.maximum(h2, 0.0)                           # [TB, E]

    # Lane-dense scores over this class tile: h2 @ class_embed.T + bias.
    out_ref[...] = (jnp.dot(h2_ref[...].astype(jnp.bfloat16), embed_t_ref[...],
                            preferred_element_type=jnp.float32)
                    + ebias_ref[...])                                # [TB, TN]


def pack_params(params, hidden_size, col_block=1024):
    """One-time prep: transpose / zero-pad / bf16-cast weights for the kernel."""
    ce = jnp.asarray(params["class_embed"], jnp.float32)        # [n_class, E]
    cb = jnp.asarray(params["class_embed_bias"], jnp.float32)   # [n_class, 1]
    w1 = jnp.asarray(params["l1_w"], jnp.float32)               # [L1, 3H+E]
    b1 = jnp.asarray(params["l1_b"], jnp.float32)               # [1, L1]
    w2 = jnp.asarray(params["l2_w"], jnp.float32)               # [E, L1]
    b2 = jnp.asarray(params["l2_b"], jnp.float32)               # [1, E]

    n_class, E = ce.shape
    L1 = w1.shape[0]
    H3 = hidden_size * 3
    DIN = H3 + E                           # 96 + 32 = 128 at the reference conf
    DIP = _round_up(DIN, 128)              # full-lane first-layer contraction
    L1P = _round_up(L1, 128)               # full MXU columns / full-lane h1
    NCP = _round_up(n_class, 128)          # lane-dense scores
    TN = NCP if NCP <= col_block else col_block
    NCP = _round_up(NCP, TN)               # class-axis grid divides evenly

    embed_t = jnp.zeros((E, NCP), jnp.bfloat16).at[:, :n_class].set(
        ce.T.astype(jnp.bfloat16))
    ebias = jnp.zeros((1, NCP), jnp.float32).at[0, :n_class].set(cb[:, 0])

    w1_t = jnp.zeros((DIP, L1P), jnp.bfloat16).at[:DIN, :L1].set(
        w1.T.astype(jnp.bfloat16))
    b1p = jnp.zeros((1, L1P), jnp.float32).at[:, :L1].set(b1)
    w2_t = jnp.zeros((L1P, E), jnp.bfloat16).at[:L1].set(
        w2.T.astype(jnp.bfloat16))

    return {
        "class_embed": ce,      # unpadded f32: wrapper-side cur-class gather only
        "embed_t": embed_t,     # [E, NCP] bf16, resident for the scores matmul
        "ebias": ebias,         # [1, NCP] f32
        "w1_t": w1_t,           # [DIP, L1P] bf16
        "b1": b1p,              # [1, L1P] f32
        "w2_t": w2_t,           # [L1P, E] bf16
        "b2": b2,               # [1, E] f32
    }


@functools.partial(jax.jit, static_argnames=("row_block", "col_block"))
def policy_forward(packed, bag_vec, cur_class_batch, next_classes_batch,
                   row_block=256, col_block=1024):
    """Fused MLP + all-class scoring kernel; K-candidate gather in the wrapper."""
    B, H3 = bag_vec.shape
    E, NCP = packed["embed_t"].shape
    DIP, L1P = packed["w1_t"].shape

    TB = min(_round_up(B, 16), row_block)       # rows per step (bf16 sublane x16)
    B_pad = _round_up(B, TB)
    TN = min(NCP, col_block)                    # class columns per step
    assert NCP % TN == 0 and TB % 16 == 0

    # Wrapper-side cur-class embedding gather + concat: DIN = H3 + E lanes.
    cur_e = jnp.take(packed["class_embed"],
                     cur_class_batch.astype(jnp.int32), axis=0)       # [B, E]
    x = jnp.concatenate([bag_vec.astype(jnp.float32), cur_e], axis=1)  # [B, DIN]
    x_pad = jnp.zeros((B_pad, DIP), jnp.bfloat16).at[:B, :H3 + E].set(
        x.astype(jnp.bfloat16))

    flops = 2 * B_pad * (DIP * L1P + L1P * E + E * NCP)
    bytes_accessed = (x_pad.size * 2 + packed["w1_t"].size * 2
                      + packed["w2_t"].size * 2 + packed["embed_t"].size * 2
                      + packed["b1"].size * 4 + packed["b2"].size * 4
                      + packed["ebias"].size * 4 + B_pad * NCP * 4)

    scores = pl.pallas_call(
        policy_scores_kernel,
        out_shape=jax.ShapeDtypeStruct((B_pad, NCP), jnp.float32),
        grid_spec=pltpu.PrefetchScalarGridSpec(
            num_scalar_prefetch=0,
            grid=(B_pad // TB, NCP // TN),
            in_specs=[
                pl.BlockSpec((TB, DIP), lambda i, j: (i, 0)),   # x rows
                pl.BlockSpec((DIP, L1P), lambda i, j: (0, 0)),  # W1^T (resident)
                pl.BlockSpec((1, L1P), lambda i, j: (0, 0)),    # b1
                pl.BlockSpec((L1P, E), lambda i, j: (0, 0)),    # W2^T (resident)
                pl.BlockSpec((1, E), lambda i, j: (0, 0)),      # b2
                pl.BlockSpec((E, TN), lambda i, j: (0, j)),     # class_embed^T tile
                pl.BlockSpec((1, TN), lambda i, j: (0, j)),     # class bias tile
            ],
            out_specs=pl.BlockSpec((TB, TN), lambda i, j: (i, j)),
            scratch_shapes=[pltpu.VMEM((TB, E), jnp.float32)],  # h2 carried over j
        ),
        compiler_params=pltpu.CompilerParams(
            dimension_semantics=("parallel", "arbitrary"),
            vmem_limit_bytes=32 * 1024 * 1024),
        cost_estimate=pl.CostEstimate(flops=flops, transcendentals=0,
                                      bytes_accessed=bytes_accessed),
    )(x_pad, packed["w1_t"], packed["b1"], packed["w2_t"], packed["b2"],
      packed["embed_t"], packed["ebias"])

    # probs[b, k] = scores[b, next_classes_batch[b, k]]  (== the bmm + nb)
    probs = jnp.take_along_axis(scores[:B],
                                next_classes_batch.astype(jnp.int32), axis=1)
    return probs


def make_params(key, n_class, class_embed_size, hidden_size, l1_size):
    in_dim = class_embed_size + hidden_size * 3
    k = jax.random.split(key, 6)
    limit_e = (6.0 / (n_class + class_embed_size)) ** 0.5
    return {
        "class_embed": jax.random.uniform(
            k[0], (n_class, class_embed_size), jnp.float32, -limit_e, limit_e),
        "class_embed_bias": jax.random.normal(k[1], (n_class, 1), jnp.float32),
        "l1_w": jax.random.uniform(
            k[2], (l1_size, in_dim), jnp.float32,
            -1.0 / in_dim ** 0.5, 1.0 / in_dim ** 0.5),
        "l1_b": jax.random.uniform(
            k[3], (1, l1_size), jnp.float32,
            -1.0 / in_dim ** 0.5, 1.0 / in_dim ** 0.5),
        "l2_w": jax.random.uniform(
            k[4], (class_embed_size, l1_size), jnp.float32,
            -1.0 / l1_size ** 0.5, 1.0 / l1_size ** 0.5),
        "l2_b": jax.random.uniform(
            k[5], (1, class_embed_size), jnp.float32,
            -1.0 / l1_size ** 0.5, 1.0 / l1_size ** 0.5),
    }


if __name__ == "__main__":
    # Small config consistent with the module (conf.use_l2 = True).
    n_class = 16
    class_embed_size = 32   # conf.class_embed_size
    hidden_size = 32        # conf.hidden_size  -> bag_vec has 3*hidden columns
    l1_size = 64            # conf.l1_size
    B, K = 4, 8             # batch, number of candidate next classes

    key = jax.random.PRNGKey(0)
    kp, kb, kc, kn = jax.random.split(key, 4)

    params = make_params(kp, n_class, class_embed_size, hidden_size, l1_size)
    packed = pack_params(params, hidden_size)

    bag_vec = jax.random.normal(kb, (B, 3 * hidden_size), jnp.float32)
    cur_class_batch = jax.random.randint(kc, (B,), 0, n_class, dtype=jnp.int32)
    next_classes_batch = jax.random.randint(kn, (B, K), 0, n_class, dtype=jnp.int32)

    probs = policy_forward(packed, bag_vec, cur_class_batch, next_classes_batch)
    probs = jax.block_until_ready(probs)

    # Reference in plain JAX on the ORIGINAL (f32, unpadded, untransposed) params.
    cur_e = jnp.take(params["class_embed"], cur_class_batch, axis=0)
    nxt_e = jnp.take(params["class_embed"], next_classes_batch, axis=0)
    nb = jnp.take(params["class_embed_bias"], next_classes_batch, axis=0)[..., 0]
    x = jnp.concatenate([bag_vec, cur_e], axis=1)
    h1 = jnp.maximum(x @ params["l1_w"].T + params["l1_b"], 0.0)
    h2 = jnp.maximum(h1 @ params["l2_w"].T + params["l2_b"], 0.0)
    ref = jnp.einsum("bke,be->bk", nxt_e, h2) + nb

    assert probs.shape == (B, K)
    # bf16 weights / activations with f32 accumulation -> small numeric drift.
    assert jnp.allclose(probs, ref, atol=5e-2, rtol=5e-2)

    print("KERNEL_OK")
</pallas_src>

<mosaic_0001>
module attributes {stable_mosaic.version = 11 : i64} {
  func.func @policy_scores_kernel(%arg0: i32, %arg1: i32, %arg2: memref<16x128xbf16, #tpu.memory_space<vmem>>, %arg3: memref<128x128xbf16, #tpu.memory_space<vmem>>, %arg4: memref<1x128xf32, #tpu.memory_space<vmem>>, %arg5: memref<128x32xbf16, #tpu.memory_space<vmem>>, %arg6: memref<1x32xf32, #tpu.memory_space<vmem>>, %arg7: memref<32x128xbf16, #tpu.memory_space<vmem>>, %arg8: memref<1x128xf32, #tpu.memory_space<vmem>>, %arg9: memref<16x128xf32, #tpu.memory_space<vmem>>, %arg10: memref<16x32xf32, #tpu.memory_space<vmem>>) attributes {dimension_semantics = [#tpu.dimension_semantics<parallel>, #tpu.dimension_semantics<arbitrary>], iteration_bounds = array<i64: 1, 1>, scalar_prefetch = 0 : i64, scratch_operands = 1 : i64, tpu.core_type = #tpu.core_type<tc>, window_params = [{transform_indices = @transform_0, window_bounds = array<i64: 16, 128>}, {pipeline_mode = #tpu.pipeline_mode<synchronous>, transform_indices = @transform_1, window_bounds = array<i64: 128, 128>}, {pipeline_mode = #tpu.pipeline_mode<synchronous>, transform_indices = @transform_2, window_bounds = array<i64: 1, 128>}, {pipeline_mode = #tpu.pipeline_mode<synchronous>, transform_indices = @transform_3, window_bounds = array<i64: 128, 32>}, {pipeline_mode = #tpu.pipeline_mode<synchronous>, transform_indices = @transform_4, window_bounds = array<i64: 1, 32>}, {transform_indices = @transform_5, window_bounds = array<i64: 32, 128>}, {transform_indices = @transform_6, window_bounds = array<i64: 1, 128>}, {transform_indices = @transform_7, window_bounds = array<i64: 16, 128>}]} {
    %c0_i32 = arith.constant 0 : i32
    %0 = arith.cmpi eq, %arg1, %c0_i32 : i32
    %1 = arith.extui %0 : i1 to i32
    %c0_i32_0 = arith.constant 0 : i32
    %2 = arith.cmpi ne, %1, %c0_i32_0 : i32
    scf.if %2 {
      %c0_8 = arith.constant 0 : index
      %c0_9 = arith.constant 0 : index
      %11 = vector.load %arg2[%c0_8, %c0_9] : memref<16x128xbf16, #tpu.memory_space<vmem>>, vector<16x128xbf16>
      %c0_10 = arith.constant 0 : index
      %c0_11 = arith.constant 0 : index
      %12 = vector.load %arg3[%c0_10, %c0_11] : memref<128x128xbf16, #tpu.memory_space<vmem>>, vector<128x128xbf16>
      %cst_12 = arith.constant dense<0.000000e+00> : vector<16x128xf32>
      %13 = tpu.matmul %11, %12, %cst_12 {dimension_numbers = #tpu.dot_dimension_numbers<[1], [0], [0], [1], [0, 0, 1, 1], [], []>} : vector<16x128xbf16>, vector<128x128xbf16>, vector<16x128xf32> -> vector<16x128xf32>
      %c0_13 = arith.constant 0 : index
      %c0_14 = arith.constant 0 : index
      %14 = vector.load %arg4[%c0_13, %c0_14] : memref<1x128xf32, #tpu.memory_space<vmem>>, vector<1x128xf32>
      %15 = vector.broadcast %14 : vector<1x128xf32> to vector<16x128xf32>
      %16 = arith.addf %13, %15 : vector<16x128xf32>
      %cst_15 = arith.constant 0.000000e+00 : f32
      %17 = vector.broadcast %cst_15 : f32 to vector<16x128xf32>
      %18 = arith.maximumf %16, %17 : vector<16x128xf32>
      %19 = arith.truncf %18 : vector<16x128xf32> to vector<16x128xbf16>
      %c0_16 = arith.constant 0 : index
      %c0_17 = arith.constant 0 : index
      %20 = vector.load %arg5[%c0_16, %c0_17] : memref<128x32xbf16, #tpu.memory_space<vmem>>, vector<128x32xbf16>
      %cst_18 = arith.constant dense<0.000000e+00> : vector<16x32xf32>
      %21 = tpu.matmul %19, %20, %cst_18 {dimension_numbers = #tpu.dot_dimension_numbers<[1], [0], [0], [1], [0, 0, 1, 1], [], []>} : vector<16x128xbf16>, vector<128x32xbf16>, vector<16x32xf32> -> vector<16x32xf32>
      %c0_19 = arith.constant 0 : index
      %c0_20 = arith.constant 0 : index
      %22 = vector.load %arg6[%c0_19, %c0_20] : memref<1x32xf32, #tpu.memory_space<vmem>>, vector<1x32xf32>
      %23 = vector.broadcast %22 : vector<1x32xf32> to vector<16x32xf32>
      %24 = arith.addf %21, %23 : vector<16x32xf32>
      %cst_21 = arith.constant 0.000000e+00 : f32
      %25 = vector.broadcast %cst_21 : f32 to vector<16x32xf32>
      %26 = arith.maximumf %24, %25 : vector<16x32xf32>
      %c0_22 = arith.constant 0 : index
      %c0_23 = arith.constant 0 : index
      %27 = vector.load %arg10[%c0_22, %c0_23] : memref<16x32xf32, #tpu.memory_space<vmem>>, vector<16x32xf32>
      tpu.vector_store %arg10[%c0_22, %c0_23], %26 {strides = array<i32>} : memref<16x32xf32, #tpu.memory_space<vmem>>, vector<16x32xf32>,
    } else {
    }
    %c0 = arith.constant 0 : index
    %c0_1 = arith.constant 0 : index
    %3 = vector.load %arg10[%c0, %c0_1] : memref<16x32xf32, #tpu.memory_space<vmem>>, vector<16x32xf32>
    %4 = arith.truncf %3 : vector<16x32xf32> to vector<16x32xbf16>
    %c0_2 = arith.constant 0 : index
    %c0_3 = arith.constant 0 : index
    %5 = vector.load %arg7[%c0_2, %c0_3] : memref<32x128xbf16, #tpu.memory_space<vmem>>, vector<32x128xbf16>
    %cst = arith.constant dense<0.000000e+00> : vector<16x128xf32>
    %6 = tpu.matmul %4, %5, %cst {dimension_numbers = #tpu.dot_dimension_numbers<[1], [0], [0], [1], [0, 0, 1, 1], [], []>} : vector<16x32xbf16>, vector<32x128xbf16>, vector<16x128xf32> -> vector<16x128xf32>
    %c0_4 = arith.constant 0 : index
    %c0_5 = arith.constant 0 : index
    %7 = vector.load %arg8[%c0_4, %c0_5] : memref<1x128xf32, #tpu.memory_space<vmem>>, vector<1x128xf32>
    %8 = vector.broadcast %7 : vector<1x128xf32> to vector<16x128xf32>
    %9 = arith.addf %6, %8 : vector<16x128xf32>
    %c0_6 = arith.constant 0 : index
    %c0_7 = arith.constant 0 : index
    %10 = vector.load %arg9[%c0_6, %c0_7] : memref<16x128xf32, #tpu.memory_space<vmem>>, vector<16x128xf32>
    tpu.vector_store %arg9[%c0_6, %c0_7], %9 {strides = array<i32>} : memref<16x128xf32, #tpu.memory_space<vmem>>, vector<16x128xf32>,
    return
  }
  func.func @transform_0(%arg0: i32, %arg1: i32) -> (i32, i32) {
    %c0_i32 = arith.constant 0 : i32
    %c0_i32_0 = arith.constant 0 : i32
    return %arg0, %c0_i32 : i32, i32
  }
  func.func @transform_1(%arg0: i32, %arg1: i32) -> (i32, i32) {
    %c0_i32 = arith.constant 0 : i32
    %c0_i32_0 = arith.constant 0 : i32
    %c0_i32_1 = arith.constant 0 : i32
    return %c0_i32, %c0_i32_0 : i32, i32
  }
  func.func @transform_2(%arg0: i32, %arg1: i32) -> (i32, i32) {
    %c0_i32 = arith.constant 0 : i32
    %c0_i32_0 = arith.constant 0 : i32
    %c0_i32_1 = arith.constant 0 : i32
    return %c0_i32, %c0_i32_0 : i32, i32
  }
  func.func @transform_3(%arg0: i32, %arg1: i32) -> (i32, i32) {
    %c0_i32 = arith.constant 0 : i32
    %c0_i32_0 = arith.constant 0 : i32
    %c0_i32_1 = arith.constant 0 : i32
    return %c0_i32, %c0_i32_0 : i32, i32
  }
  func.func @transform_4(%arg0: i32, %arg1: i32) -> (i32, i32) {
    %c0_i32 = arith.constant 0 : i32
    %c0_i32_0 = arith.constant 0 : i32
    %c0_i32_1 = arith.constant 0 : i32
    return %c0_i32, %c0_i32_0 : i32, i32
  }
  func.func @transform_5(%arg0: i32, %arg1: i32) -> (i32, i32) {
    %c0_i32 = arith.constant 0 : i32
    %c0_i32_0 = arith.constant 0 : i32
    return %c0_i32, %arg1 : i32, i32
  }
  func.func @transform_6(%arg0: i32, %arg1: i32) -> (i32, i32) {
    %c0_i32 = arith.constant 0 : i32
    %c0_i32_0 = arith.constant 0 : i32
    return %c0_i32, %arg1 : i32, i32
  }
  func.func @transform_7(%arg0: i32, %arg1: i32) -> (i32, i32) {
    %c0_i32 = arith.constant 0 : i32
    return %arg0, %arg1 : i32, i32
  }
}

</mosaic_0001>

<llo_original>
// kernel: policy_forward.1
$region0: #{policy_forward.1}
  #allocation0 [shape = 'u32[]', space=smem, size = 0x4, offset = 0x4, fixed_abs, tag = 'smem constant byte address 0x4 - core index']
  #allocation1 [shape = 'u32[144,128]{1,0:T(1,128)}', space=vmem, size = 0x12000, scoped, tag = 'internal scratch']
  #allocation2 [shape = 'f32[16,32]{1,0:T(8,128)}', space=vmem, size = 0x2000, scoped, tag = 'scratch operand']
  %s0 = inlined_call_operand.vmem [shape: bf16[16,128], index: 0, kind: input, shape index: {}]
  %s1 = inlined_call_operand.vmem [shape: bf16[128,128], index: 1, kind: input, shape index: {}]
  %s2 = inlined_call_operand.vmem [shape: f32[1,128], index: 2, kind: input, shape index: {}]
  %s3 = inlined_call_operand.vmem [shape: bf16[128,32], index: 3, kind: input, shape index: {}]
  %s4 = inlined_call_operand.vmem [shape: f32[1,32], index: 4, kind: input, shape index: {}]
  %s5 = inlined_call_operand.vmem [shape: bf16[32,128], index: 5, kind: input, shape index: {}]
  %s6 = inlined_call_operand.vmem [shape: f32[1,128], index: 6, kind: input, shape index: {}]
  %s7 = inlined_call_operand.vmem [shape: f32[16,128], index: 7, kind: output, shape index: {}]
  %s8 = sld [smem:[#allocation0]]
  $region42: #{policy_forward.1} parent=0
    _
  %s10 = ssub.s32 1, %s8
  %s11 = scalar_select 0, %s10, %s8
  // Predicated region
  $region2: #{policy_forward.1} parent=0 // pred_check
    _
  $region3: #{policy_forward.1} parent=0 // pred_check_branch
    %13 = sbr.rel (0) target = $region5
  $region4: #{policy_forward.1} parent=0 // pred_region
    _
  $region5: #{policy_forward.1} parent=0 // pred_fallthru
    _
  // Predicated region
  $region6: #{policy_forward.1} parent=0 // pred_check
    _
  $region7: #{policy_forward.1} parent=0 // pred_check_branch
    %15 = sbr.rel (0) target = $region9
  $region8: #{policy_forward.1} parent=0 // pred_region
    _
  $region9: #{policy_forward.1} parent=0 // pred_fallthru
    _
  // Predicated region
  $region10: #{policy_forward.1} parent=0 // pred_check
    _
  $region11: #{policy_forward.1} parent=0 // pred_check_branch
    %17 = sbr.rel (0) target = $region13
  $region12: #{policy_forward.1} parent=0 // pred_region
    _
  $region13: #{policy_forward.1} parent=0 // pred_fallthru
    _
  // Predicated region
  $region14: #{policy_forward.1} parent=0 // pred_check
    _
  $region15: #{policy_forward.1} parent=0 // pred_check_branch
    %19 = sbr.rel (0) target = $region17
  $region16: #{policy_forward.1} parent=0 // pred_region
    _
  $region17: #{policy_forward.1} parent=0 // pred_fallthru
    _
  // Predicated region
  $region18: #{policy_forward.1} parent=0 // pred_check
    _
  $region19: #{policy_forward.1} parent=0 // pred_check_branch
    %21 = sbr.rel (0) target = $region21
  $region20: #{policy_forward.1} parent=0 // pred_region
    _
  $region21: #{policy_forward.1} parent=0 // pred_fallthru
    _
  // Predicated region
  $region22: #{policy_forward.1} parent=0 // pred_check
    _
  $region23: #{policy_forward.1} parent=0 // pred_check_branch
    %23 = sbr.rel (0) target = $region25
  $region24: #{policy_forward.1} parent=0 // pred_region
    _
  $region25: #{policy_forward.1} parent=0 // pred_fallthru
    _
  // Predicated region
  $region26: #{policy_forward.1} parent=0 // pred_check
    _
  $region27: #{policy_forward.1} parent=0 // pred_check_branch
    %25 = sbr.rel (0) target = $region29
  $region28: #{policy_forward.1} parent=0 // pred_region
    _
  $region29: #{policy_forward.1} parent=0 // pred_fallthru
    _
  %p27 = scmp.eq.s32.totalorder 0, 0
  // Predicated region
  $region30: #{policy_forward.1} parent=0 // pred_check
    %p28 = pneg %p27
  $region31: #{policy_forward.1} parent=0 // pred_check_branch
    %30 = sbr.rel (%p28) target = $region33
  $region32: #{policy_forward.1} parent=0 // pred_region
    %v31 = vld [vmem:[%s0] sm:$0xf]
    %v32 = vld [vmem:[%s0 + $0x4] sm:$0xf]
    %v33 = vld [vmem:[%s1] sm:$0xf]
    %v34 = vld [vmem:[%s1 + $0x4] sm:$0xf]
    %v35 = vld [vmem:[%s1 + $0x8] sm:$0xf]
    %v36 = vld [vmem:[%s1 + $0xc] sm:$0xf]
    %v37 = vld [vmem:[%s1 + $0x10] sm:$0xf]
    %v38 = vld [vmem:[%s1 + $0x14] sm:$0xf]
    %v39 = vld [vmem:[%s1 + $0x18] sm:$0xf]
    %v40 = vld [vmem:[%s1 + $0x1c] sm:$0xf]
    %v41 = vld [vmem:[%s1 + $0x20] sm:$0xf]
    %v42 = vld [vmem:[%s1 + $0x24] sm:$0xf]
    %v43 = vld [vmem:[%s1 + $0x28] sm:$0xf]
    %v44 = vld [vmem:[%s1 + $0x2c] sm:$0xf]
    %v45 = vld [vmem:[%s1 + $0x30] sm:$0xf]
    %v46 = vld [vmem:[%s1 + $0x34] sm:$0xf]
    %v47 = vld [vmem:[%s1 + $0x38] sm:$0xf]
    %v48 = vld [vmem:[%s1 + $0x3c] sm:$0xf]
    %v49 = vld [vmem:[%s2] sm:$0x1]
    %v51 = vlaneseq
    %v52 = vshrl.u32 %v51, 7
    %v53 = vsub.s32 0, %v52
    %v54 = vrot.slane %v49, %v53
    %v58 = vunpack.c.l.b16 %v31
    %v59 = vunpack.c.l.b16 %v32
    %v60 = vpack.c.b16 %v59, %v58
    %v78 = vunpack.c.l.b16 %v33
    %v79 = vunpack.c.l.b16 %v34
    %v80 = vunpack.c.l.b16 %v35
    %v81 = vunpack.c.l.b16 %v36
    %v82 = vunpack.c.l.b16 %v37
    %v83 = vunpack.c.l.b16 %v38
    %v84 = vunpack.c.l.b16 %v39
    %v85 = vunpack.c.l.b16 %v40
    %v86 = vunpack.c.l.b16 %v41
    %v87 = vunpack.c.l.b16 %v42
    %v88 = vunpack.c.l.b16 %v43
    %v89 = vunpack.c.l.b16 %v44
    %v90 = vunpack.c.l.b16 %v45
    %v91 = vunpack.c.l.b16 %v46
    %v92 = vunpack.c.l.b16 %v47
    %v93 = vunpack.c.l.b16 %v48
    %v94 = vpack.c.b16 %v79, %v78
    %v95 = vpack.c.b16 %v81, %v80
    %v96 = vpack.c.b16 %v83, %v82
    %v97 = vpack.c.b16 %v85, %v84
    %v98 = vpack.c.b16 %v87, %v86
    %v99 = vpack.c.b16 %v89, %v88
    %v100 = vpack.c.b16 %v91, %v90
    %v101 = vpack.c.b16 %v93, %v92
    %110 = vmatprep.subr.bf16.mxu0 0
    %111 = vmatpush1.bf16.msra.mxu0 %v101
    %112 = vmatprep.subr.bf16.mxu0 0
    %113 = vmatpush1.bf16.msra.mxu0 %v100
    %114 = vmatprep.subr.bf16.mxu0 0
    %115 = vmatpush1.bf16.msra.mxu0 %v99
    %116 = vmatprep.subr.bf16.mxu0 0
    %117 = vmatpush1.bf16.msra.mxu0 %v98
    %118 = vmatprep.subr.bf16.mxu0 0
    %119 = vmatpush1.bf16.msra.mxu0 %v97
    %120 = vmatprep.subr.bf16.mxu0 0
    %121 = vmatpush1.bf16.msra.mxu0 %v96
    %122 = vmatprep.subr.bf16.mxu0 0
    %123 = vmatpush1.bf16.msra.mxu0 %v95
    %124 = vmatprep.subr.bf16.mxu0 0
    %125 = vmatpush1.bf16.msra.mxu0 %v94
    %126 = vmatprep.subr.bf16.mxu0 0
    %127 = vmatpush2.bf16.msra.mxu0 0
    %128 = vmatprep.subr.bf16.mxu0 0
    %129 = vmatpush2.bf16.msra.mxu0 0
    %130 = vmatprep.subr.bf16.mxu0 0
    %131 = vmatpush2.bf16.msra.mxu0 0
    %132 = vmatprep.subr.bf16.mxu0 0
    %133 = vmatpush2.bf16.msra.mxu0 0
    %134 = vmatprep.subr.bf16.mxu0 0
    %135 = vmatpush2.bf16.msra.mxu0 0
    %136 = vmatprep.subr.bf16.mxu0 0
    %137 = vmatpush2.bf16.msra.mxu0 0
    %138 = vmatprep.subr.bf16.mxu0 0
    %139 = vmatpush2.bf16.msra.mxu0 0
    %140 = vmatprep.subr.bf16.mxu0 0
    %141 = vmatpush2.bf16.msra.mxu0 0
    %142 = vmatprep.mubr.bf16.mxu0 0
    %143 = vmatmul.mubr.bf16.gmra.mxu0 %v60
    %v144 = vpop.f32.mrf.mxu0
    %v145 = vadd.f32 %v54, %v144
    %v146 = vpop.f32.mrf.mxu0
    %v147 = vpop.f32.mrf.mxu0
    %v148 = vadd.f32 %v54, %v147
    %v149 = vpop.f32.mrf.mxu0
    %150 = vdwg.mxu0
    %v151 = vmax.f32 %v145, 0.0
    %v152 = vmax.f32 %v148, 0.0
    %v153 = vpack.c.bf16 %v152, %v151
    %v154 = vld [vmem:[%s3] sm:$0xf]
    %v155 = vld [vmem:[%s3 + $0x4] sm:$0xf]
    %v156 = vld [vmem:[%s3 + $0x8] sm:$0xf]
    %v157 = vld [vmem:[%s3 + $0xc] sm:$0xf]
    %v158 = vld [vmem:[%s3 + $0x10] sm:$0xf]
    %v159 = vld [vmem:[%s3 + $0x14] sm:$0xf]
    %v160 = vld [vmem:[%s3 + $0x18] sm:$0xf]
    %v161 = vld [vmem:[%s3 + $0x1c] sm:$0xf]
    %v162 = vld [vmem:[%s3 + $0x20] sm:$0xf]
    %v163 = vld [vmem:[%s3 + $0x24] sm:$0xf]
    %v164 = vld [vmem:[%s3 + $0x28] sm:$0xf]
    %v165 = vld [vmem:[%s3 + $0x2c] sm:$0xf]
    %v166 = vld [vmem:[%s3 + $0x30] sm:$0xf]
    %v167 = vld [vmem:[%s3 + $0x34] sm:$0xf]
    %v168 = vld [vmem:[%s3 + $0x38] sm:$0xf]
    %v169 = vld [vmem:[%s3 + $0x3c] sm:$0xf]
    %v170 = vld [vmem:[%s4] sm:$0x1]
    %v172 = vlaneseq
    %v173 = vshrl.u32 %v172, 7
    %v174 = vsub.s32 0, %v173
    %v175 = vrot.slane %v170, %v174
    %v193 = vunpack.c.l.b16 %v154
    %v194 = vunpack.c.l.b16 %v155
    %v195 = vunpack.c.l.b16 %v156
    %v196 = vunpack.c.l.b16 %v157
    %v197 = vunpack.c.l.b16 %v158
    %v198 = vunpack.c.l.b16 %v159
    %v199 = vunpack.c.l.b16 %v160
    %v200 = vunpack.c.l.b16 %v161
    %v201 = vunpack.c.l.b16 %v162
    %v202 = vunpack.c.l.b16 %v163
    %v203 = vunpack.c.l.b16 %v164
    %v204 = vunpack.c.l.b16 %v165
    %v205 = vunpack.c.l.b16 %v166
    %v206 = vunpack.c.l.b16 %v167
    %v207 = vunpack.c.l.b16 %v168
    %v208 = vunpack.c.l.b16 %v169
    %v209 = vpack.c.b16 %v194, %v193
    %v210 = vpack.c.b16 %v196, %v195
    %v211 = vpack.c.b16 %v198, %v197
    %v212 = vpack.c.b16 %v200, %v199
    %v213 = vpack.c.b16 %v202, %v201
    %v214 = vpack.c.b16 %v204, %v203
    %v215 = vpack.c.b16 %v206, %v205
    %v216 = vpack.c.b16 %v208, %v207
    %225 = vmatprep.subr.bf16.mxu0 0
    %226 = vmatpush1.bf16.msra.mxu0 %v216
    %227 = vmatprep.subr.bf16.mxu0 0
    %228 = vmatpush1.bf16.msra.mxu0 %v215
    %229 = vmatprep.subr.bf16.mxu0 0
    %230 = vmatpush1.bf16.msra.mxu0 %v214
    %231 = vmatprep.subr.bf16.mxu0 0
    %232 = vmatpush1.bf16.msra.mxu0 %v213
    %233 = vmatprep.subr.bf16.mxu0 0
    %234 = vmatpush1.bf16.msra.mxu0 %v212
    %235 = vmatprep.subr.bf16.mxu0 0
    %236 = vmatpush1.bf16.msra.mxu0 %v211
    %237 = vmatprep.subr.bf16.mxu0 0
    %238 = vmatpush1.bf16.msra.mxu0 %v210
    %239 = vmatprep.subr.bf16.mxu0 0
    %240 = vmatpush1.bf16.msra.mxu0 %v209
    %241 = vmatprep.subr.bf16.mxu0 0
    %242 = vmatpush2.bf16.msra.mxu0 0
    %243 = vmatprep.subr.bf16.mxu0 0
    %244 = vmatpush2.bf16.msra.mxu0 0
    %245 = vmatprep.subr.bf16.mxu0 0
    %246 = vmatpush2.bf16.msra.mxu0 0
    %247 = vmatprep.subr.bf16.mxu0 0
    %248 = vmatpush2.bf16.msra.mxu0 0
    %249 = vmatprep.subr.bf16.mxu0 0
    %250 = vmatpush2.bf16.msra.mxu0 0
    %251 = vmatprep.subr.bf16.mxu0 0
    %252 = vmatpush2.bf16.msra.mxu0 0
    %253 = vmatprep.subr.bf16.mxu0 0
    %254 = vmatpush2.bf16.msra.mxu0 0
    %255 = vmatprep.subr.bf16.mxu0 0
    %256 = vmatpush2.bf16.msra.mxu0 0
    %257 = vmatprep.mubr.bf16.mxu0 0
    %258 = vmatmul.mubr.bf16.gmra.mxu0 %v153
    %v259 = vpop.f32.mrf.mxu0
    %v260 = vadd.f32 %v175, %v259
    %v261 = vpop.f32.mrf.mxu0
    %v262 = vpop.f32.mrf.mxu0
    %v263 = vadd.f32 %v175, %v262
    %v264 = vpop.f32.mrf.mxu0
    %265 = vdwg.mxu0
    %v266 = vmax.f32 %v260, 0.0
    %v267 = vmax.f32 %v263, 0.0
    %vm268 = vcmask 261120
    %269 = vst.msk [vmem:[#allocation2] sm:$0xff] %vm268, %v266
    %270 = vst.msk [vmem:[#allocation2 + $0x8] sm:$0xff] %vm268, %v267
  $region33: #{policy_forward.1} parent=0 // pred_fallthru
    _
  %v271 = vld [vmem:[#allocation2] sm:$0xff]
  %v272 = vld [vmem:[#allocation2 + $0x8] sm:$0xff]
  %v273 = vpack.c.bf16 %v272, %v271
  %v274 = vld [vmem:[%s5] sm:$0xf]
  %v275 = vld [vmem:[%s5 + $0x4] sm:$0xf]
  %v276 = vld [vmem:[%s5 + $0x8] sm:$0xf]
  %v277 = vld [vmem:[%s5 + $0xc] sm:$0xf]
  %v278 = vld [vmem:[%s6] sm:$0x1]
  %v280 = vlaneseq
  %v281 = vshrl.u32 %v280, 7
  %v282 = vsub.s32 0, %v281
  %v283 = vrot.slane %v278, %v282
  %v289 = vunpack.c.l.b16 %v274
  %v290 = vunpack.c.l.b16 %v275
  %v291 = vunpack.c.l.b16 %v276
  %v292 = vunpack.c.l.b16 %v277
  %v293 = vpack.c.b16 %v290, %v289
  %v294 = vpack.c.b16 %v292, %v291
  %vm297 = vcmask 261120
  %v299 = vsel %vm297, %v273, 0
  %301 = vmatprep.subr.bf16.mxu0 0
  %302 = vmatpush1.bf16.msra.mxu0 0
  %303 = vmatprep.subr.bf16.mxu0 0
  %304 = vmatpush1.bf16.msra.mxu0 0
  %305 = vmatprep.subr.bf16.mxu0 0
  %306 = vmatpush1.bf16.msra.mxu0 0
  %307 = vmatprep.subr.bf16.mxu0 0
  %308 = vmatpush1.bf16.msra.mxu0 0
  %309 = vmatprep.subr.bf16.mxu0 0
  %310 = vmatpush1.bf16.msra.mxu0 0
  %311 = vmatprep.subr.bf16.mxu0 0
  %312 = vmatpush1.bf16.msra.mxu0 0
  %313 = vmatprep.subr.bf16.mxu0 0
  %314 = vmatpush1.bf16.msra.mxu0 %v294
  %315 = vmatprep.subr.bf16.mxu0 0
  %316 = vmatpush1.bf16.msra.mxu0 %v293
  %317 = vmatprep.subr.bf16.mxu0 0
  %318 = vmatpush2.bf16.msra.mxu0 0
  %319 = vmatprep.subr.bf16.mxu0 0
  %320 = vmatpush2.bf16.msra.mxu0 0
  %321 = vmatprep.subr.bf16.mxu0 0
  %322 = vmatpush2.bf16.msra.mxu0 0
  %323 = vmatprep.subr.bf16.mxu0 0
  %324 = vmatpush2.bf16.msra.mxu0 0
  %325 = vmatprep.subr.bf16.mxu0 0
  %326 = vmatpush2.bf16.msra.mxu0 0
  %327 = vmatprep.subr.bf16.mxu0 0
  %328 = vmatpush2.bf16.msra.mxu0 0
  %329 = vmatprep.subr.bf16.mxu0 0
  %330 = vmatpush2.bf16.msra.mxu0 0
  %331 = vmatprep.subr.bf16.mxu0 0
  %332 = vmatpush2.bf16.msra.mxu0 0
  %333 = vmatprep.mubr.bf16.mxu0 0
  %334 = vmatmul.mubr.bf16.gmra.mxu0 %v299
  %v335 = vpop.f32.mrf.mxu0
  %v336 = vadd.f32 %v283, %v335
  %v337 = vpop.f32.mrf.mxu0
  %v338 = vpop.f32.mrf.mxu0
  %v339 = vadd.f32 %v283, %v338
  %v340 = vpop.f32.mrf.mxu0
  %341 = vdwg.mxu0
  %342 = vst [vmem:[%s7] sm:$0xff] %v336
  %343 = vst [vmem:[%s7 + $0x8] sm:$0xff] %v339
  // Predicated region
  $region34: #{policy_forward.1} parent=0 // pred_check
    _
  $region35: #{policy_forward.1} parent=0 // pred_check_branch
    %345 = sbr.rel (0) target = $region37
  $region36: #{policy_forward.1} parent=0 // pred_region
    _
  $region37: #{policy_forward.1} parent=0 // pred_fallthru
    _
  // Predicated region
  $region38: #{policy_forward.1} parent=0 // pred_check
    _
  $region39: #{policy_forward.1} parent=0 // pred_check_branch
    %347 = sbr.rel (0) target = $region41
  $region40: #{policy_forward.1} parent=0 // pred_region
    _
  $region41: #{policy_forward.1} parent=0 // pred_fallthru
    _

</llo_original>
